<compile_context>
chip_gen: v7x
topology: tpu7x:2x2x1
jax: 0.10.0
libtpu: 0.0.40
codegen_flags: <defaults>
</compile_context>

<pallas_src>
import functools

import jax
import jax.numpy as jnp
from jax.experimental import pallas as pl
from jax.experimental.pallas import tpu as pltpu

NUM_CLASS = 19
IGNORE_INDEX = -100


def _round_up(x, m):
    return ((x + m - 1) // m) * m


def _cdiv(a, b):
    return -(-a // b)


# ---------------------------------------------------------------------------
# Pallas kernel: masked softmax cross-entropy, lane-dense accumulation
# ---------------------------------------------------------------------------
def _ce_kernel(logit_ref, lab_ref, loss_ref, cnt_ref, *, hw, tiles_per_split):
    # grid = (S, N, tiles_per_split); axis 2 is the reduction over pixel tiles.
    s = pl.program_id(0)
    k = pl.program_id(2)

    @pl.when(k == 0)
    def _():
        loss_ref[...] = jnp.zeros_like(loss_ref)
        cnt_ref[...] = jnp.zeros_like(cnt_ref)

    x = logit_ref[0].astype(jnp.float32)          # (C, T): classes x pixels
    lab = lab_ref[0]                              # (1, T) int32
    num_class, tile = x.shape

    # Explicit lane mask for the ragged last tile and fully-padded split
    # tiles: only pixels with global index < HW contribute.  (The IGNORE
    # padded labels already cover this; the mask is hardening against any
    # future cross-lane op touching garbage OOB lanes.)
    global_tile = s * tiles_per_split + k
    pix = global_tile * tile + jax.lax.broadcasted_iota(jnp.int32, (1, tile), 1)
    in_bounds = pix < hw                                          # (1, T)

    # numerically stable log-sum-exp over the class (sublane) axis;
    # xs = x - m is computed once and reused for both exp and the target
    # gather so the accumulated term is log(sum_exp) - (x_t - m).
    m = jnp.max(x, axis=0, keepdims=True)                         # (1, T)
    xs = x - m                                                    # (C, T)
    sum_exp = jnp.sum(jnp.exp(xs), axis=0, keepdims=True)         # (1, T)

    cls = jax.lax.broadcasted_iota(jnp.int32, x.shape, 0)         # (C, T)
    tgt_shift = jnp.sum(jnp.where(cls == lab, xs, 0.0),
                        axis=0, keepdims=True)                    # (1, T)

    # valid <=> label in [0, C) and pixel in bounds.  This covers
    # ignore_index=-100, the IGNORE-padded ragged tail, and (unlike PyTorch,
    # which raises a device assert) silently drops other out-of-range labels.
    valid = (lab >= 0) & (lab < num_class) & in_bounds            # (1, T)

    # lane-dense accumulation: pure VPU adds, no per-step reduction/relayout
    loss_ref[0, 0] = loss_ref[0, 0] + jnp.where(
        valid, jnp.log(sum_exp) - tgt_shift, 0.0)
    cnt_ref[0, 0] = cnt_ref[0, 0] + valid.astype(jnp.float32)


def cross_entropy_ignore(logit_nchw, labels_nhw, tile=32768, num_splits=2):
    """Mean softmax cross-entropy with ignore_index=-100.

    logit_nchw: (N, C, H, W) float (bf16 recommended upstream; f32 accepted).
    labels_nhw: (N, H, W) integer labels.
    """
    N, C, H, W = logit_nchw.shape
    HW = H * W

    # Lane-aligned pixel tile, capped, chosen to minimize round-up slack.
    hw_aligned = _round_up(HW, 128)
    if hw_aligned <= tile:
        tile = hw_aligned
    else:
        tile = _round_up(_cdiv(HW, _cdiv(HW, tile)), 128)

    num_logit_blocks = _cdiv(HW, tile)            # last one may be ragged
    S = num_splits if num_logit_blocks >= num_splits else 1
    num_tiles_pad = _round_up(num_logit_blocks, S)
    tiles_per_split = num_tiles_pad // S
    HW_pad = num_tiles_pad * tile

    # Free reshape: no transpose, no HBM copy of the logits (any float dtype;
    # do NOT cast here -- the kernel upcasts per-block to f32).
    logit3 = logit_nchw.reshape(N, C, HW)
    lab = labels_nhw.reshape(N, HW).astype(jnp.int32)
    if HW_pad != HW:
        # Only the (tiny) label tensor is padded; the ragged tail of the
        # un-padded logits is masked in-kernel (IGNORE labels + lane mask).
        lab = jnp.pad(lab, ((0, 0), (0, HW_pad - HW)),
                      constant_values=IGNORE_INDEX)
    lab3 = lab.reshape(N, 1, HW_pad)

    kernel = functools.partial(_ce_kernel, hw=HW,
                               tiles_per_split=tiles_per_split)

    def logit_map(s, n, k):
        # Fully padded split tiles re-read the last valid logit block (their
        # labels are all IGNORE, so they contribute zero); no logit block
        # start ever lies past the array.
        return (n, 0, jnp.minimum(s * tiles_per_split + k,
                                  num_logit_blocks - 1))

    def label_map(s, n, k):
        return (n, 0, s * tiles_per_split + k)

    def out_map(s, n, k):
        return (s, n, 0, 0)

    cost = pl.CostEstimate(
        flops=6 * N * HW * C,
        transcendentals=N * HW * (C + 1),
        bytes_accessed=(N * C * HW * logit_nchw.dtype.itemsize
                        + N * HW_pad * 4 + 2 * S * N * tile * 4),
    )

    loss_part, cnt_part = pl.pallas_call(
        kernel,
        out_shape=(jax.ShapeDtypeStruct((S, N, 1, tile), jnp.float32),
                   jax.ShapeDtypeStruct((S, N, 1, tile), jnp.float32)),
        grid_spec=pltpu.PrefetchScalarGridSpec(
            num_scalar_prefetch=0,
            grid=(S, N, tiles_per_split),
            in_specs=[
                # TODO(synk): if xprof still shows exposed logit DMA on v7x,
                # add pipeline_mode=pl.Buffered(3) here.
                pl.BlockSpec((1, C, tile), logit_map),
                pl.BlockSpec((1, 1, tile), label_map),
            ],
            out_specs=[pl.BlockSpec((1, 1, 1, tile), out_map),
                       pl.BlockSpec((1, 1, 1, tile), out_map)],
        ),
        compiler_params=pltpu.CompilerParams(
            dimension_semantics=("parallel", "parallel", "arbitrary")),
        cost_estimate=cost,
    )(logit3, lab3)

    # Finish the (cheap) cross-lane reduction in JAX.  If every pixel is
    # ignored this divides by zero -> NaN, matching PyTorch mean reduction.
    return jnp.sum(loss_part) / jnp.sum(cnt_part)


# ---------------------------------------------------------------------------
# Glue: nearest-neighbour resize (F.interpolate mode='nearest' semantics)
# ---------------------------------------------------------------------------
def _nearest_resize_labels(lab, out_size):
    """lab: (N, Hin, Win) -> (N, out_size, out_size), src = floor(dst*in/out)."""
    _, Hin, Win = lab.shape
    rows = (jnp.arange(out_size) * Hin) // out_size
    cols = (jnp.arange(out_size) * Win) // out_size
    return lab[:, rows[:, None], cols[None, :]]


def _nearest_resize_2d(x, out_h, out_w):
    in_h, in_w = x.shape
    rows = (jnp.arange(out_h) * in_h) // out_h
    cols = (jnp.arange(out_w) * in_w) // out_w
    return x[rows[:, None], cols[None, :]]


_PART_COLORS = jnp.array(
    [[0, 0, 0], [255, 85, 0], [255, 170, 0], [255, 0, 85], [255, 0, 170],
     [0, 255, 0], [85, 255, 0], [170, 255, 0], [0, 255, 85], [0, 255, 170],
     [0, 0, 255], [85, 0, 255], [170, 0, 255], [0, 85, 255], [0, 170, 255],
     [255, 255, 0], [255, 255, 85], [255, 255, 170], [255, 0, 255],
     [255, 85, 255], [255, 170, 255], [0, 255, 255], [85, 255, 255],
     [170, 255, 255]], dtype=jnp.uint8)


def vis_map(parsing_2d, num_of_class=NUM_CLASS):
    # TODO(synk): original uses cv2.resize(INTER_NEAREST) on host numpy;
    # approximated here with floor(dst*in/out) nearest indexing in pure JAX.
    p = jnp.mod(parsing_2d.astype(jnp.int32), 256)        # emulate .astype(uint8)
    p = _nearest_resize_2d(p, 256, 256)
    in_range = p <= num_of_class
    colors = jnp.take(_PART_COLORS, jnp.clip(p, 0, num_of_class), axis=0)
    return jnp.where(in_range[..., None], colors, jnp.uint8(255))


# ---------------------------------------------------------------------------
# Parsing_Loss.forward equivalent
# ---------------------------------------------------------------------------
def parsing_loss_forward(logit, gt_lab, ref_lab):
    """logit: (N, C, H, W) bf16/f32 ; gt_lab, ref_lab: (N, Hg, Wg) labels."""
    N, C, H, W = logit.shape
    out_size = W  # F.interpolate(size=logit.size()[-1]) resizes both dims to W

    gt = _nearest_resize_labels(gt_lab.astype(jnp.float32), out_size)
    gt = gt.astype(jnp.int32)                                   # (N, W, W)
    ref = _nearest_resize_labels(ref_lab.astype(jnp.float32), out_size)
    ref = ref.astype(jnp.int32)                                 # (N, W, W)

    # Logits are fed in whatever dtype the producer emits (bf16 preferred:
    # halves HBM traffic); no cast here so no extra HBM round trip.
    loss = cross_entropy_ignore(logit, gt)

    vis_fake = vis_map(jnp.argmax(logit[0], axis=0))
    vis_gt = vis_map(gt[0])
    vis_ref = vis_map(ref[0])
    return loss, vis_fake, vis_gt, vis_ref


if __name__ == "__main__":
    key = jax.random.PRNGKey(0)
    k1, k2, k3, k4, k5, k6 = jax.random.split(key, 6)

    # ---- test 1: full forward (bf16 logits produced upstream) -------------
    N, C, H, W = 2, NUM_CLASS, 16, 16
    logit = jax.random.normal(k1, (N, C, H, W), dtype=jnp.float32)
    logit = logit.astype(jnp.bfloat16)            # producer emits bf16
    gt_lab = jax.random.randint(k2, (N, 32, 32), 0, NUM_CLASS).astype(jnp.int32)
    ref_lab = jax.random.randint(k3, (N, 32, 32), 0, NUM_CLASS).astype(jnp.int32)

    loss, vis_fake, vis_gt, vis_ref = parsing_loss_forward(logit, gt_lab, ref_lab)
    loss = jax.block_until_ready(loss)
    jax.block_until_ready((vis_fake, vis_gt, vis_ref))

    gt_small = _nearest_resize_labels(gt_lab.astype(jnp.float32), W).astype(jnp.int32)
    logp = jax.nn.log_softmax(
        jnp.transpose(logit.astype(jnp.float32), (0, 2, 3, 1)), axis=-1)
    ref_loss = -jnp.mean(jnp.take_along_axis(logp, gt_small[..., None], axis=-1))
    assert jnp.allclose(loss, ref_loss, rtol=1e-5, atol=1e-5), (loss, ref_loss)

    # ---- test 2: multi-tile + core-split + ragged tail + ignore labels ----
    N2, H2, W2 = 1, 48, 48                        # HW=2304, tile forced to 512
    logit2 = jax.random.normal(k4, (N2, C, H2, W2), dtype=jnp.float32)
    logit2 = logit2.astype(jnp.bfloat16)
    lab2 = jax.random.randint(k5, (N2, H2, W2), 0, NUM_CLASS)
    drop = jax.random.bernoulli(k6, 0.1, (N2, H2, W2))
    lab2 = jnp.where(drop, IGNORE_INDEX, lab2).astype(jnp.int32)

    loss2 = jax.block_until_ready(cross_entropy_ignore(logit2, lab2, tile=512))

    logp2 = jax.nn.log_softmax(
        jnp.transpose(logit2.astype(jnp.float32), (0, 2, 3, 1)), axis=-1)
    valid2 = lab2 >= 0
    nll2 = -jnp.take_along_axis(
        logp2, jnp.where(valid2, lab2, 0)[..., None], axis=-1)[..., 0]
    ref_loss2 = jnp.sum(jnp.where(valid2, nll2, 0.0)) / jnp.sum(valid2)
    assert jnp.allclose(loss2, ref_loss2, rtol=1e-5, atol=1e-5), (loss2, ref_loss2)

    print("KERNEL_OK")
</pallas_src>

<mosaic_0001>
module attributes {stable_mosaic.version = 11 : i64} {
  func.func @_ce_kernel(%arg0: i32, %arg1: i32, %arg2: i32, %arg3: memref<1x19x256xbf16, #tpu.memory_space<vmem>>, %arg4: memref<1x1x256xi32, #tpu.memory_space<vmem>>, %arg5: memref<1x1x1x256xf32, #tpu.memory_space<vmem>>, %arg6: memref<1x1x1x256xf32, #tpu.memory_space<vmem>>) attributes {dimension_semantics = [#tpu.dimension_semantics<parallel>, #tpu.dimension_semantics<parallel>, #tpu.dimension_semantics<arbitrary>], iteration_bounds = array<i64: 1, 2, 1>, scalar_prefetch = 0 : i64, scratch_operands = 0 : i64, tpu.core_type = #tpu.core_type<tc>, window_params = [{transform_indices = @transform_0, window_bounds = array<i64: 1, 19, 256>}, {transform_indices = @transform_1, window_bounds = array<i64: 1, 1, 256>}, {transform_indices = @transform_2, window_bounds = array<i64: 1, 1, 1, 256>}, {transform_indices = @transform_3, window_bounds = array<i64: 1, 1, 1, 256>}]} {
    %c0_i32 = arith.constant 0 : i32
    %0 = arith.cmpi eq, %arg2, %c0_i32 : i32
    %1 = arith.extui %0 : i1 to i32
    %c0_i32_0 = arith.constant 0 : i32
    %2 = arith.cmpi ne, %1, %c0_i32_0 : i32
    scf.if %2 {
      %cst_28 = arith.constant 0.000000e+00 : f32
      %54 = vector.broadcast %cst_28 : f32 to vector<1x1x1x256xf32>
      %c0_29 = arith.constant 0 : index
      %c0_30 = arith.constant 0 : index
      %c0_31 = arith.constant 0 : index
      %c0_32 = arith.constant 0 : index
      %55 = vector.load %arg5[%c0_29, %c0_30, %c0_31, %c0_32] : memref<1x1x1x256xf32, #tpu.memory_space<vmem>>, vector<1x1x1x256xf32>
      tpu.vector_store %arg5[%c0_29, %c0_30, %c0_31, %c0_32], %54 {strides = array<i32>} : memref<1x1x1x256xf32, #tpu.memory_space<vmem>>, vector<1x1x1x256xf32>,
      %cst_33 = arith.constant 0.000000e+00 : f32
      %56 = vector.broadcast %cst_33 : f32 to vector<1x1x1x256xf32>
      %c0_34 = arith.constant 0 : index
      %c0_35 = arith.constant 0 : index
      %c0_36 = arith.constant 0 : index
      %c0_37 = arith.constant 0 : index
      %57 = vector.load %arg6[%c0_34, %c0_35, %c0_36, %c0_37] : memref<1x1x1x256xf32, #tpu.memory_space<vmem>>, vector<1x1x1x256xf32>
      tpu.vector_store %arg6[%c0_34, %c0_35, %c0_36, %c0_37], %56 {strides = array<i32>} : memref<1x1x1x256xf32, #tpu.memory_space<vmem>>, vector<1x1x1x256xf32>,
    } else {
    }
    %c0 = arith.constant 0 : index
    %c0_1 = arith.constant 0 : index
    %c0_2 = arith.constant 0 : index
    %3 = vector.load %arg3[%c0, %c0_1, %c0_2] : memref<1x19x256xbf16, #tpu.memory_space<vmem>>, vector<1x19x256xbf16>
    %4 = vector.shape_cast %3 : vector<1x19x256xbf16> to vector<19x256xbf16>
    %5 = arith.extf %4 : vector<19x256xbf16> to vector<19x256xf32>
    %c0_3 = arith.constant 0 : index
    %c0_4 = arith.constant 0 : index
    %c0_5 = arith.constant 0 : index
    %6 = vector.load %arg4[%c0_3, %c0_4, %c0_5] : memref<1x1x256xi32, #tpu.memory_space<vmem>>, vector<1x1x256xi32>
    %7 = vector.shape_cast %6 : vector<1x1x256xi32> to vector<1x256xi32>
    %c1_i32 = arith.constant 1 : i32
    %8 = arith.muli %arg0, %c1_i32 : i32
    %9 = arith.addi %8, %arg2 : i32
    %c256_i32 = arith.constant 256 : i32
    %10 = arith.muli %9, %c256_i32 : i32
    %11 = tpu.iota {dimensions = array<i32: 1>} : vector<1x256xi32>
    %12 = vector.broadcast %10 : i32 to vector<1x256xi32>
    %13 = arith.addi %12, %11 : vector<1x256xi32>
    %c256_i32_6 = arith.constant 256 : i32
    %14 = vector.broadcast %c256_i32_6 : i32 to vector<1x256xi32>
    %15 = arith.cmpi slt, %13, %14 : vector<1x256xi32>
    %cst = arith.constant dense<0xFF800000> : vector<256xf32>
    %16 = vector.multi_reduction <maximumf>, %5, %cst [0] : vector<19x256xf32> to vector<256xf32>
    %17 = vector.shape_cast %16 : vector<256xf32> to vector<1x256xf32>
    %18 = vector.broadcast %17 : vector<1x256xf32> to vector<19x256xf32>
    %19 = arith.subf %5, %18 : vector<19x256xf32>
    %20 = math.exp %19 : vector<19x256xf32>
    %cst_7 = arith.constant dense<0.000000e+00> : vector<256xf32>
    %21 = vector.multi_reduction <add>, %20, %cst_7 [0] : vector<19x256xf32> to vector<256xf32>
    %22 = vector.shape_cast %21 : vector<256xf32> to vector<1x256xf32>
    %23 = tpu.iota {dimensions = array<i32: 0>} : vector<19x256xi32>
    %24 = vector.broadcast %7 : vector<1x256xi32> to vector<19x256xi32>
    %25 = arith.cmpi eq, %23, %24 : vector<19x256xi32>
    %cst_8 = arith.constant 0.000000e+00 : f32
    %26 = vector.broadcast %cst_8 : f32 to vector<19x256xf32>
    %27 = arith.select %25, %19, %26 : vector<19x256xi1>, vector<19x256xf32>
    %cst_9 = arith.constant dense<0.000000e+00> : vector<256xf32>
    %28 = vector.multi_reduction <add>, %27, %cst_9 [0] : vector<19x256xf32> to vector<256xf32>
    %29 = vector.shape_cast %28 : vector<256xf32> to vector<1x256xf32>
    %c0_i32_10 = arith.constant 0 : i32
    %30 = vector.broadcast %c0_i32_10 : i32 to vector<1x256xi32>
    %31 = arith.cmpi sge, %7, %30 : vector<1x256xi32>
    %c19_i32 = arith.constant 19 : i32
    %32 = vector.broadcast %c19_i32 : i32 to vector<1x256xi32>
    %33 = arith.cmpi slt, %7, %32 : vector<1x256xi32>
    %34 = arith.andi %31, %33 : vector<1x256xi1>
    %35 = arith.andi %34, %15 : vector<1x256xi1>
    %c0_11 = arith.constant 0 : index
    %c0_12 = arith.constant 0 : index
    %c0_13 = arith.constant 0 : index
    %c0_14 = arith.constant 0 : index
    %36 = vector.load %arg5[%c0_11, %c0_12, %c0_13, %c0_14] : memref<1x1x1x256xf32, #tpu.memory_space<vmem>>, vector<1x1x1x256xf32>
    %37 = vector.shape_cast %36 : vector<1x1x1x256xf32> to vector<1x256xf32>
    %38 = math.log %22 : vector<1x256xf32>
    %39 = arith.subf %38, %29 : vector<1x256xf32>
    %cst_15 = arith.constant 0.000000e+00 : f32
    %40 = vector.broadcast %cst_15 : f32 to vector<1x256xf32>
    %41 = arith.select %35, %39, %40 : vector<1x256xi1>, vector<1x256xf32>
    %42 = arith.addf %37, %41 : vector<1x256xf32>
    %c0_16 = arith.constant 0 : index
    %c0_17 = arith.constant 0 : index
    %c0_18 = arith.constant 0 : index
    %c0_19 = arith.constant 0 : index
    %43 = vector.load %arg5[%c0_16, %c0_17, %c0_18, %c0_19] : memref<1x1x1x256xf32, #tpu.memory_space<vmem>>, vector<1x1x1x256xf32>
    %44 = vector.shape_cast %43 : vector<1x1x1x256xf32> to vector<1x256xf32>
    %45 = vector.shape_cast %42 : vector<1x256xf32> to vector<1x1x1x256xf32>
    tpu.vector_store %arg5[%c0_16, %c0_17, %c0_18, %c0_19], %45 {strides = array<i32>} : memref<1x1x1x256xf32, #tpu.memory_space<vmem>>, vector<1x1x1x256xf32>,
    %c0_20 = arith.constant 0 : index
    %c0_21 = arith.constant 0 : index
    %c0_22 = arith.constant 0 : index
    %c0_23 = arith.constant 0 : index
    %46 = vector.load %arg6[%c0_20, %c0_21, %c0_22, %c0_23] : memref<1x1x1x256xf32, #tpu.memory_space<vmem>>, vector<1x1x1x256xf32>
    %47 = vector.shape_cast %46 : vector<1x1x1x256xf32> to vector<1x256xf32>
    %48 = arith.extui %35 : vector<1x256xi1> to vector<1x256xi32>
    %49 = arith.sitofp %48 : vector<1x256xi32> to vector<1x256xf32>
    %50 = arith.addf %47, %49 : vector<1x256xf32>
    %c0_24 = arith.constant 0 : index
    %c0_25 = arith.constant 0 : index
    %c0_26 = arith.constant 0 : index
    %c0_27 = arith.constant 0 : index
    %51 = vector.load %arg6[%c0_24, %c0_25, %c0_26, %c0_27] : memref<1x1x1x256xf32, #tpu.memory_space<vmem>>, vector<1x1x1x256xf32>
    %52 = vector.shape_cast %51 : vector<1x1x1x256xf32> to vector<1x256xf32>
    %53 = vector.shape_cast %50 : vector<1x256xf32> to vector<1x1x1x256xf32>
    tpu.vector_store %arg6[%c0_24, %c0_25, %c0_26, %c0_27], %53 {strides = array<i32>} : memref<1x1x1x256xf32, #tpu.memory_space<vmem>>, vector<1x1x1x256xf32>,
    return
  }
  func.func @transform_0(%arg0: i32, %arg1: i32, %arg2: i32) -> (i32, i32, i32) {
    %c1_i32 = arith.constant 1 : i32
    %0 = arith.muli %arg0, %c1_i32 : i32
    %1 = arith.addi %0, %arg2 : i32
    %c0_i32 = arith.constant 0 : i32
    %2 = arith.minsi %1, %c0_i32 : i32
    %c0_i32_0 = arith.constant 0 : i32
    %c0_i32_1 = arith.constant 0 : i32
    return %arg1, %c0_i32_0, %2 : i32, i32, i32
  }
  func.func @transform_1(%arg0: i32, %arg1: i32, %arg2: i32) -> (i32, i32, i32) {
    %c1_i32 = arith.constant 1 : i32
    %0 = arith.muli %arg0, %c1_i32 : i32
    %1 = arith.addi %0, %arg2 : i32
    %c0_i32 = arith.constant 0 : i32
    %c0_i32_0 = arith.constant 0 : i32
    return %arg1, %c0_i32, %1 : i32, i32, i32
  }
  func.func @transform_2(%arg0: i32, %arg1: i32, %arg2: i32) -> (i32, i32, i32, i32) {
    %c0_i32 = arith.constant 0 : i32
    %c0_i32_0 = arith.constant 0 : i32
    %c0_i32_1 = arith.constant 0 : i32
    return %arg0, %arg1, %c0_i32, %c0_i32_0 : i32, i32, i32, i32
  }
  func.func @transform_3(%arg0: i32, %arg1: i32, %arg2: i32) -> (i32, i32, i32, i32) {
    %c0_i32 = arith.constant 0 : i32
    %c0_i32_0 = arith.constant 0 : i32
    %c0_i32_1 = arith.constant 0 : i32
    return %arg0, %arg1, %c0_i32, %c0_i32_0 : i32, i32, i32, i32
  }
}

</mosaic_0001>

<llo_original>
// kernel: tpu_custom_call.1
$region0: #{tpu_custom_call.1}
  #allocation0 [shape = 'u32[]', space=smem, size = 0x4, offset = 0x4, fixed_abs, tag = 'smem constant byte address 0x4 - core index']
  #allocation1 [shape = 'u32[144,128]{1,0:T(1,128)}', space=vmem, size = 0x12000, scoped, tag = 'internal scratch']
  %s0 = inlined_call_operand.vmem [shape: bf16[2,19,256], index: 0, kind: input, shape index: {}]
  %s1 = inlined_call_operand.vmem [shape: s32[2,1,256], index: 1, kind: input, shape index: {}]
  %s2 = inlined_call_operand.hbm [shape: f32[1,2,1,256], index: 2, kind: output, shape index: {0}]
  %s3 = inlined_call_operand.hbm [shape: f32[1,2,1,256], index: 3, kind: output, shape index: {1}]
  %4 = xla_tuple %s2, %s3
  %s5 = sld [smem:[#allocation0]]
  $region53: #{tpu_custom_call.1} parent=0
    _
  %s7 = ssub.s32 1, %s5
  %s8 = scalar_select 0, %s7, %s5
  $region1: #{tpu_custom_call.1} parent=0
    #allocation2 [shape = 'u8[2048]{0}', space=vmem, size = 0x800, scoped, tag = 'output window, operand 0']
    #allocation3 [shape = 's32[2]{0}', space=sflag, size = 0x8, scoped, tag = 'scoped memory for tpu_custom_call.1']
    #allocation4 [shape = 'u8[2048]{0}', space=vmem, size = 0x800, scoped, tag = 'output window, operand 1']
    #allocation5 [shape = 's32[2]{0}', space=sflag, size = 0x8, scoped, tag = 'scoped memory for tpu_custom_call.1']
    %9 = vsyncpa [#allocation3], 0
    %s10 = scalar_lea.sflag [#allocation3], 1
    %11 = vsyncpa %s10, 0
    %12 = vsyncpa [#allocation5], 0
    %s13 = scalar_lea.sflag [#allocation5], 1
    %14 = vsyncpa %s13, 0
    loop: start=0, step=1, limit=4
    $region2: #{tpu_custom_call.1} parent=1 // loop_pre_header
      _
    $region3: #{tpu_custom_call.1} parent=1 // loop_header
      %s16 = sphi 0, %s20
      %p17 = scmp.ge.s32.totalorder %s16, 4
      %s23 = sphi 0, %s42
      %s24 = sphi 0, %s38
      %s25 = sphi 0, %s34
      %s26 = sphi 0, %s23
      %s27 = sphi 0, %s24
      %s28 = sphi 0, %s25
      %s29 = sphi 0, %s26
      %s30 = sphi 0, %s27
      %s31 = sphi 0, %s28
      %s53 = sphi 0, %s55
      %s56 = sphi 0, %s53
      %s57 = sphi 0, %s56
      %s73 = sphi 0, %s57
      %s83 = sphi 0, %s85
      %s86 = sphi 0, %s83
      %s87 = sphi 0, %s86
      %s103 = sphi 0, %s87
      %s111 = sphi 0, %s113
      %s114 = sphi 0, %s111
      %s115 = sphi 0, %s114
      %s131 = sphi 0, %s115
      %s139 = sphi 0, %s141
      %s142 = sphi 0, %s139
      %s143 = sphi 0, %s142
      %s159 = sphi 0, %s143
    $region4: #{tpu_custom_call.1} parent=1 // loop_header_branch
      %19 = sbr.rel (%p17) target = $region8
    $region5: #{tpu_custom_call.1} parent=1 // loop_body
      %s21 = ssub.s32 %s16, 1
      %s22 = ssub.s32 %s16, 2
      %s32 = sadd.s32 1, %s25
      %p33 = scmp.ge.s32.totalorder %s32, 1
      %s34 = scalar_select %p33, 0, %s32
      %s35 = sadd.s32 1, %s24
      %s36 = scalar_select %p33, %s35, %s24
      %p37 = scmp.ge.s32.totalorder %s36, 2
      %s38 = scalar_select %p37, 0, %s36
      %s39 = sadd.s32 1, %s23
      %s40 = scalar_select %p37, %s39, %s23
      %p41 = scmp.ge.s32.totalorder %s40, 1
      %s42 = scalar_select %p41, 0, %s40
      %s43 = sadd.s32 %s23, %s25
      %p44 = scmp.lt.s32.totalorder %s43, 0
      %s45 = scalar_select %p44, %s43, 0
      %s46 = sadd.s32 %s42, %s34
      %p47 = scmp.lt.s32.totalorder %s46, 0
      %s48 = scalar_select %p47, %s46, 0
      %s49 = ssub.s32 %s24, %s38
      %s50 = ssub.s32 %s45, %s48
      %s51 = sor.u32 %s49, %s50
      %p52 = scmp.eq.s32.totalorder %s51, 0
      %s54 = sadd.s32 %s53, 1
      %s55 = scalar_select %p52, %s53, %s54
      %p58 = pneg %p52
      %p59 = scmp.eq.s32.totalorder %s16, 1
      %p60 = por %p58, %p59
      %p61 = scmp.ne.s32.totalorder %s53, %s56
      %p62 = scmp.eq.s32.totalorder %s16, 0
      %p63 = por %p61, %p62
      %p64 = scmp.ne.s32.totalorder %s53, %s56
      %p65 = scmp.eq.s32.totalorder %s21, 1
      %p66 = por %p64, %p65
      %p67 = scmp.ne.s32.totalorder %s56, %s57
      %p68 = scmp.eq.s32.totalorder %s21, 0
      %p69 = por %p67, %p68
      %p70 = scmp.ne.s32.totalorder %s56, %s57
      %p71 = scmp.eq.s32.totalorder %s22, 1
      %p72 = por %p70, %p71
      %p74 = scmp.ne.s32.totalorder %s57, %s73
      %p75 = scmp.eq.s32.totalorder %s22, 0
      %p76 = por %p74, %p75
      %s77 = sadd.s32 %s23, %s25
      %s78 = sadd.s32 %s42, %s34
      %s79 = ssub.s32 %s24, %s38
      %s80 = ssub.s32 %s77, %s78
      %s81 = sor.u32 %s79, %s80
      %p82 = scmp.eq.s32.totalorder %s81, 0
      %s84 = sadd.s32 %s83, 1
      %s85 = scalar_select %p82, %s83, %s84
      %p88 = pneg %p82
      %p89 = scmp.eq.s32.totalorder %s16, 1
      %p90 = por %p88, %p89
      %p91 = scmp.ne.s32.totalorder %s83, %s86
      %p92 = scmp.eq.s32.totalorder %s16, 0
      %p93 = por %p91, %p92
      %p94 = scmp.ne.s32.totalorder %s83, %s86
      %p95 = scmp.eq.s32.totalorder %s21, 1
      %p96 = por %p94, %p95
      %p97 = scmp.ne.s32.totalorder %s86, %s87
      %p98 = scmp.eq.s32.totalorder %s21, 0
      %p99 = por %p97, %p98
      %p100 = scmp.ne.s32.totalorder %s86, %s87
      %p101 = scmp.eq.s32.totalorder %s22, 1
      %p102 = por %p100, %p101
      %p104 = scmp.ne.s32.totalorder %s87, %s103
      %p105 = scmp.eq.s32.totalorder %s22, 0
      %p106 = por %p104, %p105
      %s107 = ssub.s32 %s23, %s42
      %s108 = ssub.s32 %s24, %s38
      %s109 = sor.u32 %s107, %s108
      %p110 = scmp.eq.s32.totalorder %s109, 0
      %s112 = sadd.s32 %s111, 1
      %s113 = scalar_select %p110, %s111, %s112
      %p116 = pneg %p110
      %p117 = scmp.eq.s32.totalorder %s16, 1
      %p118 = por %p116, %p117
      %p119 = scmp.ne.s32.totalorder %s111, %s114
      %p120 = scmp.eq.s32.totalorder %s16, 0
      %p121 = por %p119, %p120
      %p122 = scmp.ne.s32.totalorder %s111, %s114
      %p123 = scmp.eq.s32.totalorder %s21, 1
      %p124 = por %p122, %p123
      %p125 = scmp.ne.s32.totalorder %s114, %s115
      %p126 = scmp.eq.s32.totalorder %s21, 0
      %p127 = por %p125, %p126
      %p128 = scmp.ne.s32.totalorder %s114, %s115
      %p129 = scmp.eq.s32.totalorder %s22, 1
      %p130 = por %p128, %p129
      %p132 = scmp.ne.s32.totalorder %s115, %s131
      %p133 = scmp.eq.s32.totalorder %s22, 0
      %p134 = por %p132, %p133
      %s135 = ssub.s32 %s23, %s42
      %s136 = ssub.s32 %s24, %s38
      %s137 = sor.u32 %s135, %s136
      %p138 = scmp.eq.s32.totalorder %s137, 0
      %s140 = sadd.s32 %s139, 1
      %s141 = scalar_select %p138, %s139, %s140
      %p144 = pneg %p138
      %p145 = scmp.eq.s32.totalorder %s16, 1
      %p146 = por %p144, %p145
      %p147 = scmp.ne.s32.totalorder %s139, %s142
      %p148 = scmp.eq.s32.totalorder %s16, 0
      %p149 = por %p147, %p148
      %p150 = scmp.ne.s32.totalorder %s139, %s142
      %p151 = scmp.eq.s32.totalorder %s21, 1
      %p152 = por %p150, %p151
      %p153 = scmp.ne.s32.totalorder %s142, %s143
      %p154 = scmp.eq.s32.totalorder %s21, 0
      %p155 = por %p153, %p154
      %p156 = scmp.ne.s32.totalorder %s142, %s143
      %p157 = scmp.eq.s32.totalorder %s22, 1
      %p158 = por %p156, %p157
      %p160 = scmp.ne.s32.totalorder %s143, %s159
      %p161 = scmp.eq.s32.totalorder %s22, 0
      %p162 = por %p160, %p161
      %p163 = scmp.le.s32.totalorder 1, %s16
      %p164 = scmp.lt.s32.totalorder %s16, 3
      %p165 = pnand %p163, %p164
      %p166 = pneg %p165
      // Predicated region
      $region9: #{tpu_custom_call.1} parent=5 // pred_check
        _
      $region10: #{tpu_custom_call.1} parent=5 // pred_check_branch
        %168 = sbr.rel (%p165) target = $region12
      $region11: #{tpu_custom_call.1} parent=5 // pred_region
        %s169 = ssub.s32 %s16, 1
      $region12: #{tpu_custom_call.1} parent=5 // pred_fallthru
        _
      %p170 = scmp.lt.s32.totalorder %s16, 2
      // Predicated region
      $region13: #{tpu_custom_call.1} parent=5 // pred_check
        %p171 = pneg %p170
      $region14: #{tpu_custom_call.1} parent=5 // pred_check_branch
        %173 = sbr.rel (%p171) target = $region16
      $region15: #{tpu_custom_call.1} parent=5 // pred_region
        // Predicated region
        $region17: #{tpu_custom_call.1} parent=15 // pred_check
          %p174 = pneg %p63
        $region18: #{tpu_custom_call.1} parent=15 // pred_check_branch
          %176 = sbr.rel (%p174) target = $region20
        $region19: #{tpu_custom_call.1} parent=15 // pred_region
          %s177 = sadd.s32 %s23, %s25
          %p178 = scmp.lt.s32.totalorder %s177, 0
          %s179 = scalar_select %p178, %s177, 0
          %s180 = smul.u32 2, %s179
          %p181 = scmp.lt.s32.totalorder %s24, 1
          %s182 = scalar_select %p181, %s24, 1
          %p183 = scmp.lt.s32.totalorder %s180, 1
          %s184 = scalar_select %p183, %s180, 1
          %s185 = smul.addr %s182, 6
          %s186 = sadd.s32 %s184, %s185
          %s187 = smul.addr %s186, 4
          %s188 = scalar_lea.vmem %s0, %s187
          %s189 = sadd.s32 %s23, %s25
          %p190 = scmp.lt.s32.totalorder %s189, 0
          %s191 = scalar_select %p190, %s189, 0
          %s192 = smul.u32 2, %s191
        $region20: #{tpu_custom_call.1} parent=15 // pred_fallthru
          _
        // Predicated region
        $region21: #{tpu_custom_call.1} parent=15 // pred_check
          %p193 = pneg %p93
        $region22: #{tpu_custom_call.1} parent=15 // pred_check_branch
          %195 = sbr.rel (%p193) target = $region24
        $region23: #{tpu_custom_call.1} parent=15 // pred_region
          %s196 = sadd.s32 %s23, %s25
          %s197 = smul.u32 2, %s196
          %p198 = scmp.lt.s32.totalorder %s24, 1
          %s199 = scalar_select %p198, %s24, 1
          %p200 = scmp.lt.s32.totalorder %s197, 1
          %s201 = scalar_select %p200, %s197, 1
          %s202 = smul.addr %s199, 2
          %s203 = sadd.s32 %s201, %s202
          %s204 = scalar_lea.vmem %s1, %s203
          %s205 = sadd.s32 %s23, %s25
          %s206 = smul.u32 2, %s205
        $region24: #{tpu_custom_call.1} parent=15 // pred_fallthru
          _
      $region16: #{tpu_custom_call.1} parent=5 // pred_fallthru
        _
      %p207 = scmp.le.s32.totalorder 1, %s16
      %p208 = scmp.lt.s32.totalorder %s16, 3
      %p209 = pnand %p207, %p208
      %p210 = pneg %p209
      // Predicated region
      $region25: #{tpu_custom_call.1} parent=5 // pred_check
        _
      $region26: #{tpu_custom_call.1} parent=5 // pred_check_branch
        %212 = sbr.rel (%p209) target = $region28
      $region27: #{tpu_custom_call.1} parent=5 // pred_region
        %s213 = ssub.s32 %s16, 1
        %s214 = sadd.s32 %s26, %s28
        %p215 = scmp.lt.s32.totalorder %s214, 0
        %s216 = scalar_select %p215, %s214, 0
        %s217 = smul.u32 2, %s216
        %p218 = scmp.lt.s32.totalorder %s27, 1
        %s219 = scalar_select %p218, %s27, 1
        %p220 = scmp.lt.s32.totalorder %s217, 1
        %s221 = scalar_select %p220, %s217, 1
        %s222 = smul.addr %s219, 6
        %s223 = sadd.s32 %s221, %s222
        %s224 = smul.addr %s223, 4
        %s225 = scalar_lea.vmem %s0, %s224
        %p226 = pneg %p69
        %p227 = pneg %p66
        %s228 = sadd.s32 %s26, %s28
        %s229 = smul.u32 2, %s228
        %p230 = scmp.lt.s32.totalorder %s27, 1
        %s231 = scalar_select %p230, %s27, 1
        %p232 = scmp.lt.s32.totalorder %s229, 1
        %s233 = scalar_select %p232, %s229, 1
        %s234 = smul.addr %s231, 2
        %s235 = sadd.s32 %s233, %s234
        %s236 = scalar_lea.vmem %s1, %s235
        %p237 = pneg %p99
        %p238 = pneg %p96
        %p239 = pneg %p127
        %p240 = pneg %p124
        %s241 = sand.u32 %s114, 1
        %s242 = scalar_lea.sflag [#allocation3], %s241
        %s243 = sand.u32 %s114, 1
        %s244 = smul.addr %s243, 2
        %s245 = scalar_lea.vmem [#allocation2], %s244
        %p246 = pneg %p155
        %p247 = pneg %p152
        %s248 = sand.u32 %s142, 1
        %s249 = scalar_lea.sflag [#allocation5], %s248
        %s250 = sand.u32 %s142, 1
        %s251 = smul.addr %s250, 2
        %s252 = scalar_lea.vmem [#allocation4], %s251
        %s253 = sadd.s32 %s26, %s28
        %p254 = scmp.lt.s32.totalorder %s253, 0
        %s255 = scalar_select %p254, %s253, 0
        %s256 = smul.u32 2, %s255
        %p257 = scmp.lt.s32.totalorder %s27, 1
        %s258 = scalar_select %p257, %s27, 1
        %p259 = scmp.lt.s32.totalorder %s256, 1
        %s260 = scalar_select %p259, %s256, 1
        %s261 = smul.addr %s258, 6
        %s262 = sadd.s32 %s260, %s261
        %s263 = smul.addr %s262, 4
        %s264 = scalar_lea.vmem %s0, %s263
        %s265 = sadd.s32 %s26, %s28
        %p266 = scmp.lt.s32.totalorder %s265, 0
        %s267 = scalar_select %p266, %s265, 0
        %s268 = smul.u32 2, %s267
        %s269 = sadd.s32 %s26, %s28
        %s270 = smul.u32 2, %s269
        %p271 = scmp.lt.s32.totalorder %s27, 1
        %s272 = scalar_select %p271, %s27, 1
        %p273 = scmp.lt.s32.totalorder %s270, 1
        %s274 = scalar_select %p273, %s270, 1
        %s275 = smul.addr %s272, 2
        %s276 = sadd.s32 %s274, %s275
        %s277 = scalar_lea.vmem %s1, %s276
        %s278 = sadd.s32 %s26, %s28
        %s279 = smul.u32 2, %s278
        %p280 = scmp.eq.s32.totalorder %s28, 0
        // Predicated region
        $region29: #{tpu_custom_call.1} parent=27 // pred_check
          %p281 = pneg %p280
        $region30: #{tpu_custom_call.1} parent=27 // pred_check_branch
          %283 = sbr.rel (%p281) target = $region32
        $region31: #{tpu_custom_call.1} parent=27 // pred_region
          %v284 = vlaneseq
          %vm285 = vcmp.ge.s32.totalorder %v284, 0
          %vm286 = vcmp.lt.s32.totalorder %v284, 256
          %vm287 = vmand %vm285, %vm286
          %288 = vst.msk [vmem:[%s245] sm:$0x3] %vm287, 0.0
          %289 = vst.msk [vmem:[%s252] sm:$0x3] %vm287, 0.0
        $region32: #{tpu_custom_call.1} parent=27 // pred_fallthru
          _
        %v290 = vld [vmem:[%s264] sm:$0xff]
        %v291 = vld [vmem:[%s264 + $0x8] sm:$0xff]
        %v292 = vld [vmem:[%s264 + $0x10] sm:$0x33]
        %v293 = vunpack.c.l.bf16 %v290
        %v294 = vunpack.c.h.bf16 %v290
        %v295 = vunpack.c.l.bf16 %v291
        %v296 = vunpack.c.h.bf16 %v291
        %v297 = vunpack.c.l.bf16 %v292
        %v298 = vunpack.c.h.bf16 %v292
        %v299 = vld [vmem:[%s277] sm:$0x3]
        %s300 = sadd.s32 %s26, %s28
        %s301 = smul.u32 %s300, 256
        %v302 = vlaneseq
        %v303 = vand.u32 %v302, 127
        %v304 = vadd.s32 %v303, 128
        %v305 = vstv %s301
        %v306 = vadd.s32 %v305, %v303
        %v307 = vadd.s32 %v305, %v304
        %vm308 = vcmp.lt.s32.totalorder %v306, 256
        %vm309 = vcmp.lt.s32.totalorder %v307, 256
        %vm310 = vcmask 1042432
        %v311 = vsel %vm310, %v297, -inf
        %v312 = vmax.f32 %v293, %v311
        %v313 = vmax.f32 %v312, %v295
        %v314 = vrot.slane %v313, 4
        %v315 = vmax.f32 %v313, %v314
        %v316 = vrot.slane %v315, 2
        %v317 = vmax.f32 %v315, %v316
        %v318 = vrot.slane %v317, 1
        %v319 = vmax.f32 %v317, %v318
        %v320 = vsel %vm310, %v298, -inf
        %v321 = vmax.f32 %v294, %v320
        %v322 = vmax.f32 %v321, %v296
        %v323 = vrot.slane %v322, 4
        %v324 = vmax.f32 %v322, %v323
        %v325 = vrot.slane %v324, 2
        %v326 = vmax.f32 %v324, %v325
        %v327 = vrot.slane %v326, 1
        %v328 = vmax.f32 %v326, %v327
        %v329 = vsub.f32 %v293, %v319
        %v330 = vsub.f32 %v294, %v328
        %v331 = vsub.f32 %v295, %v319
        %v332 = vsub.f32 %v296, %v328
        %v333 = vsub.f32 %v297, %v319
        %v334 = vsub.f32 %v298, %v328
        %v335 = vmul.f32 %v329, 1.442695
        %v336 = vpow.pop %v335
        %v337 = vmul.f32 %v330, 1.442695
        %v338 = vpow.pop %v337
        %v339 = vmul.f32 %v331, 1.442695
        %v340 = vpow.pop %v339
        %v341 = vmul.f32 %v332, 1.442695
        %v342 = vpow.pop %v341
        %v343 = vmul.f32 %v333, 1.442695
        %v344 = vpow.pop %v343
        %v345 = vmul.f32 %v334, 1.442695
        %v346 = vpow.pop %v345
        %v347 = vadd.f32 %v336, %v340
        %v348 = vsel %vm310, %v344, 0.0
        %v349 = vadd.f32 %v347, %v348
        %v350 = vrot.slane %v349, 4
        %v351 = vadd.f32 %v349, %v350
        %v352 = vrot.slane %v351, 2
        %v353 = vadd.f32 %v351, %v352
        %v354 = vrot.slane %v353, 1
        %v355 = vadd.f32 %v353, %v354
        %v356 = vadd.f32 %v338, %v342
        %v357 = vsel %vm310, %v346, 0.0
        %v358 = vadd.f32 %v356, %v357
        %v359 = vrot.slane %v358, 4
        %v360 = vadd.f32 %v358, %v359
        %v361 = vrot.slane %v360, 2
        %v362 = vadd.f32 %v360, %v361
        %v363 = vrot.slane %v362, 1
        %v364 = vadd.f32 %v362, %v363
        %v365 = vlaneseq
        %v366 = vshrl.u32 %v365, 7
        %v367 = vadd.s32 %v366, 8
        %v368 = vadd.s32 %v366, 16
        %v369 = vlaneseq
        %v370 = vshrl.u32 %v369, 7
        %v371 = vsub.s32 0, %v370
        %v372 = vrot.slane %v299, %v371
        %v373 = vlaneseq
        %v374 = vshrl.u32 %v373, 7
        %v375 = vsub.s32 1, %v374
        %v376 = vrot.slane %v299, %v375
        %vm377 = vcmp.eq.s32.totalorder %v366, %v372
        %vm378 = vcmp.eq.s32.totalorder %v366, %v376
        %vm379 = vcmp.eq.s32.totalorder %v367, %v372
        %vm380 = vcmp.eq.s32.totalorder %v367, %v376
        %vm381 = vcmp.eq.s32.totalorder %v368, %v372
        %vm382 = vcmp.eq.s32.totalorder %v368, %v376
        %v383 = vsel %vm377, %v329, 0.0
        %v384 = vsel %vm378, %v330, 0.0
        %v385 = vsel %vm379, %v331, 0.0
        %v386 = vsel %vm380, %v332, 0.0
        %v387 = vsel %vm381, %v333, 0.0
        %v388 = vsel %vm382, %v334, 0.0
        %v389 = vadd.f32 %v383, %v385
        %v390 = vsel %vm310, %v387, 0.0
        %v391 = vadd.f32 %v389, %v390
        %v392 = vrot.slane %v391, 4
        %v393 = vadd.f32 %v391, %v392
        %v394 = vrot.slane %v393, 2
        %v395 = vadd.f32 %v393, %v394
        %v396 = vrot.slane %v395, 1
        %v397 = vadd.f32 %v395, %v396
        %v398 = vadd.f32 %v384, %v386
        %v399 = vsel %vm310, %v388, 0.0
        %v400 = vadd.f32 %v398, %v399
        %v401 = vrot.slane %v400, 4
        %v402 = vadd.f32 %v400, %v401
        %v403 = vrot.slane %v402, 2
        %v404 = vadd.f32 %v402, %v403
        %v405 = vrot.slane %v404, 1
        %v406 = vadd.f32 %v404, %v405
        %vm407 = vcmp.ge.s32.totalorder %v299, 0
        %vm408 = vcmp.lt.s32.totalorder %v299, 19
        %vm409 = vmand %vm407, %vm408
        %v410 = vsel %vm308, 1, 0
        %v411 = vsel %vm309, 1, 0
        %v412 = vcombine.low %v410, %v411
        %v414 = vunpack.c.l.s4 1966171168
        %v415 = vunpack.c.0.s8 %v414
        %v416 = vlaneseq
        %v417 = vshrl.u32 %v416, 7
        %v418 = vsub.s32 %v415, %v417
        %v419 = vrot.slane %v412, %v418
        %v421 = vunpack.c.l.s4 1966171168
        %v422 = vunpack.c.0.s8 %v421
        %v423 = vlaneseq
        %v424 = vshrl.u32 %v423, 7
        %v425 = vsub.s32 %v422, %v424
        %v426 = vrot.slane %v419, %v425
        %vm427 = vcmp.ne.s32.totalorder %v426, 0
        %vm428 = vmand %vm409, %vm427
        %v429 = vld [vmem:[%s245] sm:$0x3]
        %v430 = vlog2.pop %v355
        %v431 = vmul.f32 %v430, 0.6931472
        %v432 = vlog2.pop %v364
        %v433 = vmul.f32 %v432, 0.6931472
        %v434 = vsub.f32 %v431, %v397
        %v435 = vsub.f32 %v433, %v406
        %v438 = vcombine.low %v434, %v435
        %v440 = vunpack.c.l.s4 1966171168
        %v441 = vunpack.c.0.s8 %v440
        %v442 = vlaneseq
        %v443 = vshrl.u32 %v442, 7
        %v444 = vsub.s32 %v441, %v443
        %v445 = vrot.slane %v438, %v444
        %v447 = vunpack.c.l.s4 1966171168
        %v448 = vunpack.c.0.s8 %v447
        %v449 = vlaneseq
        %v450 = vshrl.u32 %v449, 7
        %v451 = vsub.s32 %v448, %v450
        %v452 = vrot.slane %v445, %v451
        %v454 = vsel %vm428, %v452, 0.0
        %v455 = vadd.f32 %v429, %v454
        %v456 = vlaneseq
        %vm457 = vcmp.ge.s32.totalorder %v456, 0
        %vm458 = vcmp.lt.s32.totalorder %v456, 256
        %vm459 = vmand %vm457, %vm458
        %460 = vst.msk [vmem:[%s245] sm:$0x3] %vm459, %v455
        %v461 = vld [vmem:[%s252] sm:$0x3]
        %v462 = vsel %vm428, 1, 0
        %v463 = vcvt.s32.f32 %v462
        %v464 = vadd.f32 %v461, %v463
        %465 = vst.msk [vmem:[%s252] sm:$0x3] %vm459, %v464
        %s466 = sand.u32 %s114, 1
        %s467 = scalar_lea.sflag [#allocation3], %s466
        %s468 = sand.u32 %s114, 1
        %s469 = smul.addr %s468, 2
        %s470 = scalar_lea.vmem [#allocation2], %s469
        %s471 = sand.u32 %s142, 1
        %s472 = scalar_lea.sflag [#allocation5], %s471
        %s473 = sand.u32 %s142, 1
        %s474 = smul.addr %s473, 2
        %s475 = scalar_lea.vmem [#allocation4], %s474
        // Predicated region
        $region33: #{tpu_custom_call.1} parent=27 // pred_check
          %p476 = pneg %p124
        $region34: #{tpu_custom_call.1} parent=27 // pred_check_branch
          %478 = sbr.rel (%p476) target = $region36
        $region35: #{tpu_custom_call.1} parent=27 // pred_region
          %s480 = ssub.s32 32, 32
          %481 = vsyncadd %s467, %s480
          %s482 = smul.addr %s27, 2
          %s483 = smul.addr %s26, 4
          %s484 = sadd.s32 %s482, %s483
          %s485 = smul.addr %s484, 16
          %s486 = scalar_lea.hbm %s2, %s485
          %s488 = sshll.u32 %s470, 4
          %s489 = int_to_ptr.vmem [resolvable:$true] %s488
          %491 = dma.vmem_to_hbm [thread:$0]  %s489, 32, %s486, %s467
        $region36: #{tpu_custom_call.1} parent=27 // pred_fallthru
          _
        // Predicated region
        $region37: #{tpu_custom_call.1} parent=27 // pred_check
          %p492 = pneg %p152
        $region38: #{tpu_custom_call.1} parent=27 // pred_check_branch
          %494 = sbr.rel (%p492) target = $region40
        $region39: #{tpu_custom_call.1} parent=27 // pred_region
          %s496 = ssub.s32 32, 32
          %497 = vsyncadd %s472, %s496
          %s498 = smul.addr %s27, 2
          %s499 = smul.addr %s26, 4
          %s500 = sadd.s32 %s498, %s499
          %s501 = smul.addr %s500, 16
          %s502 = scalar_lea.hbm %s3, %s501
          %s504 = sshll.u32 %s475, 4
          %s505 = int_to_ptr.vmem [resolvable:$true] %s504
          %507 = dma.vmem_to_hbm [thread:$0]  %s505, 32, %s502, %s472
        $region40: #{tpu_custom_call.1} parent=27 // pred_fallthru
          _
      $region28: #{tpu_custom_call.1} parent=5 // pred_fallthru
        _
      %p508 = scmp.le.s32.totalorder 2, %s16
      // Predicated region
      $region41: #{tpu_custom_call.1} parent=5 // pred_check
        %p509 = pneg %p508
      $region42: #{tpu_custom_call.1} parent=5 // pred_check_branch
        %511 = sbr.rel (%p509) target = $region44
      $region43: #{tpu_custom_call.1} parent=5 // pred_region
        %s512 = ssub.s32 %s16, 2
        // Predicated region
        $region45: #{tpu_custom_call.1} parent=43 // pred_check
          %p513 = pneg %p130
        $region46: #{tpu_custom_call.1} parent=43 // pred_check_branch
          %515 = sbr.rel (%p513) target = $region48
        $region47: #{tpu_custom_call.1} parent=43 // pred_region
          %s516 = sand.u32 %s115, 1
          %s517 = scalar_lea.sflag [#allocation3], %s516
          %s518 = sand.u32 %s115, 1
          %s519 = smul.addr %s518, 2
          %s520 = scalar_lea.vmem [#allocation2], %s519
          %521 = dma.done %s517, 32
        $region48: #{tpu_custom_call.1} parent=43 // pred_fallthru
          _
        // Predicated region
        $region49: #{tpu_custom_call.1} parent=43 // pred_check
          %p522 = pneg %p158
        $region50: #{tpu_custom_call.1} parent=43 // pred_check_branch
          %524 = sbr.rel (%p522) target = $region52
        $region51: #{tpu_custom_call.1} parent=43 // pred_region
          %s525 = sand.u32 %s143, 1
          %s526 = scalar_lea.sflag [#allocation5], %s525
          %s527 = sand.u32 %s143, 1
          %s528 = smul.addr %s527, 2
          %s529 = scalar_lea.vmem [#allocation4], %s528
          %530 = dma.done %s526, 32
        $region52: #{tpu_custom_call.1} parent=43 // pred_fallthru
          _
      $region44: #{tpu_custom_call.1} parent=5 // pred_fallthru
        _
    $region6: #{tpu_custom_call.1} parent=1 // loop_footer
      %s20 = sadd.s32 1, %s16
    $region7: #{tpu_custom_call.1} parent=1 // loop_footer_branch
      %15 = sbr.rel target = $region3
    $region8: #{tpu_custom_call.1} parent=1 // loop_exit
      _
    %531 = vsyncpa [#allocation3], 1
    %s532 = scalar_lea.sflag [#allocation3], 1
    %533 = vsyncpa %s532, 1
    %534 = vsyncpa [#allocation5], 1
    %s535 = scalar_lea.sflag [#allocation5], 1
    %536 = vsyncpa %s535, 1

</llo_original>
